<compile_context>
chip_gen: v6e
topology: v6e:2x2x1
jax: 0.10.0
libtpu: 0.0.40
codegen_flags: <defaults>
</compile_context>

<pallas_src>
import jax
import jax.numpy as jnp
import numpy as np
from jax.experimental import pallas as pl
from jax.experimental.pallas import tpu as pltpu


def _fuse_kernel(x_ref, w_ref, b_ref, o_ref):
    # x_ref: [L, B, Dp]  f32   (flattened attention outputs, stacked)
    # w_ref: [L, Dp, Dp] bf16  (weights stored as [in, out], i.e. torch W.T)
    # b_ref: [L, 1, Dp]  f32
    # o_ref: [B, Dp]     f32
    L = x_ref.shape[0]
    cur = x_ref[0]                                    # f32 residual chain
    for l in range(L):                                # statically unrolled
        if l > 0:
            cur = cur + x_ref[l]
        # bf16 x bf16 -> f32 accumulate: MXU native fast path, no dequant copy
        h = jnp.dot(cur.astype(jnp.bfloat16), w_ref[l],
                    preferred_element_type=jnp.float32)
        h = jnp.maximum(h + b_ref[l], 0.0)            # Linear + ReLU
        cur = h + cur                                 # residual
    o_ref[...] = cur.astype(o_ref.dtype)


def multi_layer_fuse_pallas(layer_attention_out, weights_bf16, biases):
    """layer_attention_out: list of L arrays [B, 3, H]
       weights_bf16: [L, 3H, 3H] bf16 (transposed torch weights, i.e. [in, out])
       biases:       [L, 3H]     f32
    """
    # glue: nn.Flatten + stacking the L inputs into one array (single DMA stream)
    xs = [x.reshape(x.shape[0], -1).astype(jnp.float32) for x in layer_attention_out]
    x = jnp.stack(xs, axis=0)                         # [L, B, D]
    L, B, D = x.shape

    # pad the lane dim to a multiple of 128 (e.g. D=96 -> Dp=128)
    Dp = ((D + 127) // 128) * 128
    if Dp != D:
        pad = Dp - D
        x = jnp.pad(x, ((0, 0), (0, 0), (0, pad)))
        weights_bf16 = jnp.pad(weights_bf16, ((0, 0), (0, pad), (0, pad)))
        biases = jnp.pad(biases, ((0, 0), (0, pad)))
    w = weights_bf16.astype(jnp.bfloat16)
    b3 = biases.reshape(L, 1, Dp).astype(jnp.float32)

    # Everything (L*Dp*Dp bf16 weights + activations + bias) is a few hundred
    # KiB at these sizes and at most a few MiB at hidden=256 -> trivially fits
    # the default scoped-VMEM limit on v5e/v6e/v7x.  No custom vmem limit.
    grid_spec = pltpu.PrefetchScalarGridSpec(
        num_scalar_prefetch=0,
        grid=(1,),
        in_specs=[
            pl.BlockSpec((L, B, Dp), lambda i: (0, 0, 0)),   # activations (all layers)
            pl.BlockSpec((L, Dp, Dp), lambda i: (0, 0, 0)),  # weights, bf16, resident
            pl.BlockSpec((L, 1, Dp), lambda i: (0, 0, 0)),   # biases, one DMA
        ],
        out_specs=pl.BlockSpec((B, Dp), lambda i: (0, 0)),
    )

    out = pl.pallas_call(
        _fuse_kernel,
        out_shape=jax.ShapeDtypeStruct((B, Dp), jnp.float32),
        grid_spec=grid_spec,
        compiler_params=pltpu.CompilerParams(
            dimension_semantics=("arbitrary",),
        ),
    )(x, w, b3)

    return out[:, :D]


def multi_layer_fuse_ref(layer_attention_out, weights_bf16, biases):
    """Pure-JAX reference with the same math as the kernel
    (bf16 weights, bf16 matmul LHS, f32 accumulation / residual chain)."""
    xs = [x.reshape(x.shape[0], -1).astype(jnp.float32) for x in layer_attention_out]
    b = biases.astype(jnp.float32)
    cur = xs[0]
    for i in range(weights_bf16.shape[0]):
        if i > 0:
            cur = cur + xs[i]
        h = jnp.dot(cur.astype(jnp.bfloat16), weights_bf16[i],
                    preferred_element_type=jnp.float32)
        h = jnp.maximum(h + b[i], 0.0)
        cur = h + cur
    return cur


def init_params(key, hidden_size, n_layers=4):
    D = hidden_size * 3
    # xavier_uniform_ for Linear(D, D): bound = sqrt(6 / (fan_in + fan_out))
    bound = float(np.sqrt(6.0 / (D + D)))
    weights_t = jax.random.uniform(
        key, (n_layers, D, D), dtype=jnp.float32, minval=-bound, maxval=bound
    )  # stored as [in, out] (i.e. torch W.T)
    # weights live in HBM / stream as bf16; fed directly to the MXU
    weights_bf16 = weights_t.astype(jnp.bfloat16)
    biases = jnp.zeros((n_layers, D), dtype=jnp.float32)  # nn.init.constant_(bias, 0)
    return weights_bf16, biases


if __name__ == "__main__":
    B = 2
    hidden = 32          # small hidden size; original module used 256
    D = hidden * 3

    key = jax.random.PRNGKey(0)
    k_w, k0, k1, k2, k3 = jax.random.split(key, 5)

    weights_bf16, biases = init_params(k_w, hidden)

    layer_attention_out = [
        jax.random.normal(k, (B, 3, hidden), dtype=jnp.float32)
        for k in (k0, k1, k2, k3)
    ]

    out = multi_layer_fuse_pallas(layer_attention_out, weights_bf16, biases)
    out = jax.block_until_ready(out)

    ref = multi_layer_fuse_ref(layer_attention_out, weights_bf16, biases)
    # Kernel and reference use identical bf16-weight / f32-accumulate math;
    # tolerance only covers MXU-vs-XLA matmul rounding differences.
    np.testing.assert_allclose(np.asarray(out), np.asarray(ref), rtol=2e-2, atol=2e-2)

    assert out.shape == (B, D)
    print("KERNEL_OK")
</pallas_src>

<mosaic_0001>
module attributes {stable_mosaic.version = 11 : i64} {
  func.func @_fuse_kernel(%arg0: i32, %arg1: memref<4x2x128xf32, #tpu.memory_space<vmem>>, %arg2: memref<4x128x128xbf16, #tpu.memory_space<vmem>>, %arg3: memref<4x1x128xf32, #tpu.memory_space<vmem>>, %arg4: memref<2x128xf32, #tpu.memory_space<vmem>>) attributes {dimension_semantics = [#tpu.dimension_semantics<arbitrary>], iteration_bounds = array<i64: 1>, scalar_prefetch = 0 : i64, scratch_operands = 0 : i64, tpu.core_type = #tpu.core_type<tc>, window_params = [{pipeline_mode = #tpu.pipeline_mode<synchronous>, transform_indices = @transform_0, window_bounds = array<i64: 4, 2, 128>}, {pipeline_mode = #tpu.pipeline_mode<synchronous>, transform_indices = @transform_1, window_bounds = array<i64: 4, 128, 128>}, {pipeline_mode = #tpu.pipeline_mode<synchronous>, transform_indices = @transform_2, window_bounds = array<i64: 4, 1, 128>}, {pipeline_mode = #tpu.pipeline_mode<synchronous>, transform_indices = @transform_3, window_bounds = array<i64: 2, 128>}]} {
    %c0 = arith.constant 0 : index
    %c0_0 = arith.constant 0 : index
    %c0_1 = arith.constant 0 : index
    %0 = vector.load %arg1[%c0, %c0_0, %c0_1] : memref<4x2x128xf32, #tpu.memory_space<vmem>>, vector<1x2x128xf32>
    %1 = vector.shape_cast %0 : vector<1x2x128xf32> to vector<2x128xf32>
    %2 = arith.truncf %1 : vector<2x128xf32> to vector<2x128xbf16>
    %c0_2 = arith.constant 0 : index
    %c0_3 = arith.constant 0 : index
    %c0_4 = arith.constant 0 : index
    %3 = vector.load %arg2[%c0_2, %c0_3, %c0_4] : memref<4x128x128xbf16, #tpu.memory_space<vmem>>, vector<1x128x128xbf16>
    %4 = vector.shape_cast %3 : vector<1x128x128xbf16> to vector<128x128xbf16>
    %cst = arith.constant dense<0.000000e+00> : vector<2x128xf32>
    %5 = tpu.matmul %2, %4, %cst {dimension_numbers = #tpu.dot_dimension_numbers<[1], [0], [0], [1], [0, 0, 1, 1], [], []>} : vector<2x128xbf16>, vector<128x128xbf16>, vector<2x128xf32> -> vector<2x128xf32>
    %c0_5 = arith.constant 0 : index
    %c0_6 = arith.constant 0 : index
    %c0_7 = arith.constant 0 : index
    %6 = vector.load %arg3[%c0_5, %c0_6, %c0_7] : memref<4x1x128xf32, #tpu.memory_space<vmem>>, vector<1x1x128xf32>
    %7 = vector.shape_cast %6 : vector<1x1x128xf32> to vector<1x128xf32>
    %8 = vector.broadcast %7 : vector<1x128xf32> to vector<2x128xf32>
    %9 = arith.addf %5, %8 : vector<2x128xf32>
    %cst_8 = arith.constant 0.000000e+00 : f32
    %10 = vector.broadcast %cst_8 : f32 to vector<2x128xf32>
    %11 = arith.maximumf %9, %10 : vector<2x128xf32>
    %12 = arith.addf %11, %1 : vector<2x128xf32>
    %c1 = arith.constant 1 : index
    %c0_9 = arith.constant 0 : index
    %c0_10 = arith.constant 0 : index
    %13 = vector.load %arg1[%c1, %c0_9, %c0_10] : memref<4x2x128xf32, #tpu.memory_space<vmem>>, vector<1x2x128xf32>
    %14 = vector.shape_cast %13 : vector<1x2x128xf32> to vector<2x128xf32>
    %15 = arith.addf %12, %14 : vector<2x128xf32>
    %16 = arith.truncf %15 : vector<2x128xf32> to vector<2x128xbf16>
    %c1_11 = arith.constant 1 : index
    %c0_12 = arith.constant 0 : index
    %c0_13 = arith.constant 0 : index
    %17 = vector.load %arg2[%c1_11, %c0_12, %c0_13] : memref<4x128x128xbf16, #tpu.memory_space<vmem>>, vector<1x128x128xbf16>
    %18 = vector.shape_cast %17 : vector<1x128x128xbf16> to vector<128x128xbf16>
    %cst_14 = arith.constant dense<0.000000e+00> : vector<2x128xf32>
    %19 = tpu.matmul %16, %18, %cst_14 {dimension_numbers = #tpu.dot_dimension_numbers<[1], [0], [0], [1], [0, 0, 1, 1], [], []>} : vector<2x128xbf16>, vector<128x128xbf16>, vector<2x128xf32> -> vector<2x128xf32>
    %c1_15 = arith.constant 1 : index
    %c0_16 = arith.constant 0 : index
    %c0_17 = arith.constant 0 : index
    %20 = vector.load %arg3[%c1_15, %c0_16, %c0_17] : memref<4x1x128xf32, #tpu.memory_space<vmem>>, vector<1x1x128xf32>
    %21 = vector.shape_cast %20 : vector<1x1x128xf32> to vector<1x128xf32>
    %22 = vector.broadcast %21 : vector<1x128xf32> to vector<2x128xf32>
    %23 = arith.addf %19, %22 : vector<2x128xf32>
    %cst_18 = arith.constant 0.000000e+00 : f32
    %24 = vector.broadcast %cst_18 : f32 to vector<2x128xf32>
    %25 = arith.maximumf %23, %24 : vector<2x128xf32>
    %26 = arith.addf %25, %15 : vector<2x128xf32>
    %c2 = arith.constant 2 : index
    %c0_19 = arith.constant 0 : index
    %c0_20 = arith.constant 0 : index
    %27 = vector.load %arg1[%c2, %c0_19, %c0_20] : memref<4x2x128xf32, #tpu.memory_space<vmem>>, vector<1x2x128xf32>
    %28 = vector.shape_cast %27 : vector<1x2x128xf32> to vector<2x128xf32>
    %29 = arith.addf %26, %28 : vector<2x128xf32>
    %30 = arith.truncf %29 : vector<2x128xf32> to vector<2x128xbf16>
    %c2_21 = arith.constant 2 : index
    %c0_22 = arith.constant 0 : index
    %c0_23 = arith.constant 0 : index
    %31 = vector.load %arg2[%c2_21, %c0_22, %c0_23] : memref<4x128x128xbf16, #tpu.memory_space<vmem>>, vector<1x128x128xbf16>
    %32 = vector.shape_cast %31 : vector<1x128x128xbf16> to vector<128x128xbf16>
    %cst_24 = arith.constant dense<0.000000e+00> : vector<2x128xf32>
    %33 = tpu.matmul %30, %32, %cst_24 {dimension_numbers = #tpu.dot_dimension_numbers<[1], [0], [0], [1], [0, 0, 1, 1], [], []>} : vector<2x128xbf16>, vector<128x128xbf16>, vector<2x128xf32> -> vector<2x128xf32>
    %c2_25 = arith.constant 2 : index
    %c0_26 = arith.constant 0 : index
    %c0_27 = arith.constant 0 : index
    %34 = vector.load %arg3[%c2_25, %c0_26, %c0_27] : memref<4x1x128xf32, #tpu.memory_space<vmem>>, vector<1x1x128xf32>
    %35 = vector.shape_cast %34 : vector<1x1x128xf32> to vector<1x128xf32>
    %36 = vector.broadcast %35 : vector<1x128xf32> to vector<2x128xf32>
    %37 = arith.addf %33, %36 : vector<2x128xf32>
    %cst_28 = arith.constant 0.000000e+00 : f32
    %38 = vector.broadcast %cst_28 : f32 to vector<2x128xf32>
    %39 = arith.maximumf %37, %38 : vector<2x128xf32>
    %40 = arith.addf %39, %29 : vector<2x128xf32>
    %c3 = arith.constant 3 : index
    %c0_29 = arith.constant 0 : index
    %c0_30 = arith.constant 0 : index
    %41 = vector.load %arg1[%c3, %c0_29, %c0_30] : memref<4x2x128xf32, #tpu.memory_space<vmem>>, vector<1x2x128xf32>
    %42 = vector.shape_cast %41 : vector<1x2x128xf32> to vector<2x128xf32>
    %43 = arith.addf %40, %42 : vector<2x128xf32>
    %44 = arith.truncf %43 : vector<2x128xf32> to vector<2x128xbf16>
    %c3_31 = arith.constant 3 : index
    %c0_32 = arith.constant 0 : index
    %c0_33 = arith.constant 0 : index
    %45 = vector.load %arg2[%c3_31, %c0_32, %c0_33] : memref<4x128x128xbf16, #tpu.memory_space<vmem>>, vector<1x128x128xbf16>
    %46 = vector.shape_cast %45 : vector<1x128x128xbf16> to vector<128x128xbf16>
    %cst_34 = arith.constant dense<0.000000e+00> : vector<2x128xf32>
    %47 = tpu.matmul %44, %46, %cst_34 {dimension_numbers = #tpu.dot_dimension_numbers<[1], [0], [0], [1], [0, 0, 1, 1], [], []>} : vector<2x128xbf16>, vector<128x128xbf16>, vector<2x128xf32> -> vector<2x128xf32>
    %c3_35 = arith.constant 3 : index
    %c0_36 = arith.constant 0 : index
    %c0_37 = arith.constant 0 : index
    %48 = vector.load %arg3[%c3_35, %c0_36, %c0_37] : memref<4x1x128xf32, #tpu.memory_space<vmem>>, vector<1x1x128xf32>
    %49 = vector.shape_cast %48 : vector<1x1x128xf32> to vector<1x128xf32>
    %50 = vector.broadcast %49 : vector<1x128xf32> to vector<2x128xf32>
    %51 = arith.addf %47, %50 : vector<2x128xf32>
    %cst_38 = arith.constant 0.000000e+00 : f32
    %52 = vector.broadcast %cst_38 : f32 to vector<2x128xf32>
    %53 = arith.maximumf %51, %52 : vector<2x128xf32>
    %54 = arith.addf %53, %43 : vector<2x128xf32>
    %c0_39 = arith.constant 0 : index
    %c0_40 = arith.constant 0 : index
    %55 = vector.load %arg4[%c0_39, %c0_40] : memref<2x128xf32, #tpu.memory_space<vmem>>, vector<2x128xf32>
    tpu.vector_store %arg4[%c0_39, %c0_40], %54 {strides = array<i32>} : memref<2x128xf32, #tpu.memory_space<vmem>>, vector<2x128xf32>,
    return
  }
  func.func @transform_0(%arg0: i32) -> (i32, i32, i32) {
    %c0_i32 = arith.constant 0 : i32
    %c0_i32_0 = arith.constant 0 : i32
    %c0_i32_1 = arith.constant 0 : i32
    %c0_i32_2 = arith.constant 0 : i32
    return %c0_i32, %c0_i32_0, %c0_i32_1 : i32, i32, i32
  }
  func.func @transform_1(%arg0: i32) -> (i32, i32, i32) {
    %c0_i32 = arith.constant 0 : i32
    %c0_i32_0 = arith.constant 0 : i32
    %c0_i32_1 = arith.constant 0 : i32
    %c0_i32_2 = arith.constant 0 : i32
    return %c0_i32, %c0_i32_0, %c0_i32_1 : i32, i32, i32
  }
  func.func @transform_2(%arg0: i32) -> (i32, i32, i32) {
    %c0_i32 = arith.constant 0 : i32
    %c0_i32_0 = arith.constant 0 : i32
    %c0_i32_1 = arith.constant 0 : i32
    %c0_i32_2 = arith.constant 0 : i32
    return %c0_i32, %c0_i32_0, %c0_i32_1 : i32, i32, i32
  }
  func.func @transform_3(%arg0: i32) -> (i32, i32) {
    %c0_i32 = arith.constant 0 : i32
    %c0_i32_0 = arith.constant 0 : i32
    %c0_i32_1 = arith.constant 0 : i32
    return %c0_i32, %c0_i32_0 : i32, i32
  }
}

</mosaic_0001>

<llo_original>
// kernel: tpu_custom_call.1
$region0: #{tpu_custom_call.1}
  #allocation0 [shape = 'u32[]', space=smem, size = 0x4, offset = 0x4, fixed_abs, tag = 'smem constant byte address 0x4 - core index']
  #allocation1 [shape = 'u32[144,128]{1,0:T(1,128)}', space=vmem, size = 0x12000, scoped, tag = 'internal scratch']
  %s0 = inlined_call_operand.hbm [shape: f32[4,2,128], index: 0, kind: input, shape index: {}]
  %s1 = inlined_call_operand.hbm [shape: bf16[4,128,128], index: 1, kind: input, shape index: {}]
  %s2 = inlined_call_operand.hbm [shape: f32[4,1,128], index: 2, kind: input, shape index: {}]
  %s3 = inlined_call_operand.hbm [shape: f32[2,128], index: 3, kind: output, shape index: {}]
  %s4 = sld [smem:[#allocation0]]
  $region34: #{tpu_custom_call.1} parent=0
    _
  %s6 = ssub.s32 1, %s4
  %s7 = scalar_select 0, %s6, %s4
  $region1: #{tpu_custom_call.1} parent=0
    #allocation2 [shape = 'u8[4096]{0}', space=vmem, size = 0x1000, scoped, tag = 'input window, operand 0, single buffered']
    #allocation3 [shape = 's32[1]{0}', space=sflag, size = 0x4, scoped, tag = 'scoped memory for tpu_custom_call.1']
    #allocation4 [shape = 's32[1]{0}', space=sflag, size = 0x4, scoped, tag = 'scoped memory for tpu_custom_call.1']
    #allocation5 [shape = 'u8[131072]{0}', space=vmem, size = 0x20000, scoped, tag = 'input window, operand 1, single buffered']
    #allocation6 [shape = 's32[1]{0}', space=sflag, size = 0x4, scoped, tag = 'scoped memory for tpu_custom_call.1']
    #allocation7 [shape = 'u8[2048]{0}', space=vmem, size = 0x800, scoped, tag = 'input window, operand 2, single buffered']
    #allocation8 [shape = 'u8[1024]{0}', space=vmem, size = 0x400, scoped, tag = 'output window, operand 0, single buffered']
    %8 = vsyncpa [#allocation3], 0
    %9 = vsyncpa [#allocation6], 0
    %10 = vsyncpa [#allocation4], 0
    // Predicated region
    $region2: #{tpu_custom_call.1} parent=1 // pred_check
      _
    $region3: #{tpu_custom_call.1} parent=1 // pred_check_branch
      %12 = sbr.rel (0) target = $region5
    $region4: #{tpu_custom_call.1} parent=1 // pred_region
      %s14 = ssub.s32 128, 128
      %15 = vsyncadd [#allocation3], %s14
      %s16 = sshll.u32 [#allocation2], 4
      %s17 = int_to_ptr.vmem [resolvable:$true] %s16
      %22 = dma.hbm_to_vmem [thread:$0]  %s0, 128, %s17, [#allocation3], 32, 32, 2
    $region5: #{tpu_custom_call.1} parent=1 // pred_fallthru
      _
    // Predicated region
    $region6: #{tpu_custom_call.1} parent=1 // pred_check
      _
    $region7: #{tpu_custom_call.1} parent=1 // pred_check_branch
      %24 = sbr.rel (0) target = $region9
    $region8: #{tpu_custom_call.1} parent=1 // pred_region
      %s26 = ssub.s32 4096, 4096
      %27 = vsyncadd [#allocation6], %s26
      %s28 = sshll.u32 [#allocation5], 4
      %s29 = int_to_ptr.vmem [resolvable:$true] %s28
      %34 = dma.hbm_to_vmem [thread:$0]  %s1, 4096, %s29, [#allocation6], 64, 64, 4
    $region9: #{tpu_custom_call.1} parent=1 // pred_fallthru
      _
    // Predicated region
    $region10: #{tpu_custom_call.1} parent=1 // pred_check
      _
    $region11: #{tpu_custom_call.1} parent=1 // pred_check_branch
      %36 = sbr.rel (0) target = $region13
    $region12: #{tpu_custom_call.1} parent=1 // pred_region
      %s38 = ssub.s32 64, 64
      %39 = vsyncadd [#allocation6], %s38
      %s40 = sshll.u32 [#allocation7], 4
      %s41 = int_to_ptr.vmem [resolvable:$true] %s40
      %46 = dma.hbm_to_vmem [thread:$0]  %s2, 64, %s41, [#allocation6], 16, 16, 1
    $region13: #{tpu_custom_call.1} parent=1 // pred_fallthru
      _
    // Predicated region
    $region14: #{tpu_custom_call.1} parent=1 // pred_check
      _
    $region15: #{tpu_custom_call.1} parent=1 // pred_check_branch
      %48 = sbr.rel (0) target = $region17
    $region16: #{tpu_custom_call.1} parent=1 // pred_region
      %49 = dma.done [#allocation3], 128
    $region17: #{tpu_custom_call.1} parent=1 // pred_fallthru
      _
    // Predicated region
    $region18: #{tpu_custom_call.1} parent=1 // pred_check
      _
    $region19: #{tpu_custom_call.1} parent=1 // pred_check_branch
      %51 = sbr.rel (0) target = $region21
    $region20: #{tpu_custom_call.1} parent=1 // pred_region
      %52 = dma.done [#allocation6], 4096
    $region21: #{tpu_custom_call.1} parent=1 // pred_fallthru
      _
    // Predicated region
    $region22: #{tpu_custom_call.1} parent=1 // pred_check
      _
    $region23: #{tpu_custom_call.1} parent=1 // pred_check_branch
      %54 = sbr.rel (0) target = $region25
    $region24: #{tpu_custom_call.1} parent=1 // pred_region
      %55 = dma.done [#allocation6], 64
    $region25: #{tpu_custom_call.1} parent=1 // pred_fallthru
      _
    %v57 = vld [vmem:[#allocation2] sm:$0x3]
    %v58 = vpack.c.bf16 %v57, %v57
    %v59 = vld [vmem:[#allocation5] sm:$0xf]
    %v60 = vld [vmem:[#allocation5 + $0x4] sm:$0xf]
    %v61 = vld [vmem:[#allocation5 + $0x8] sm:$0xf]
    %v62 = vld [vmem:[#allocation5 + $0xc] sm:$0xf]
    %v63 = vld [vmem:[#allocation5 + $0x10] sm:$0xf]
    %v64 = vld [vmem:[#allocation5 + $0x14] sm:$0xf]
    %v65 = vld [vmem:[#allocation5 + $0x18] sm:$0xf]
    %v66 = vld [vmem:[#allocation5 + $0x1c] sm:$0xf]
    %v67 = vld [vmem:[#allocation5 + $0x20] sm:$0xf]
    %v68 = vld [vmem:[#allocation5 + $0x24] sm:$0xf]
    %v69 = vld [vmem:[#allocation5 + $0x28] sm:$0xf]
    %v70 = vld [vmem:[#allocation5 + $0x2c] sm:$0xf]
    %v71 = vld [vmem:[#allocation5 + $0x30] sm:$0xf]
    %v72 = vld [vmem:[#allocation5 + $0x34] sm:$0xf]
    %v73 = vld [vmem:[#allocation5 + $0x38] sm:$0xf]
    %v74 = vld [vmem:[#allocation5 + $0x3c] sm:$0xf]
    %v75 = vld [vmem:[#allocation7] sm:$0x1]
    %v77 = vlaneseq
    %v78 = vshrl.u32 %v77, 7
    %v79 = vsub.s32 0, %v78
    %v80 = vrot.slane %v75, %v79
    %v98 = vunpack.c.l.b16 %v59
    %v99 = vunpack.c.l.b16 %v60
    %v100 = vunpack.c.l.b16 %v61
    %v101 = vunpack.c.l.b16 %v62
    %v102 = vunpack.c.l.b16 %v63
    %v103 = vunpack.c.l.b16 %v64
    %v104 = vunpack.c.l.b16 %v65
    %v105 = vunpack.c.l.b16 %v66
    %v106 = vunpack.c.l.b16 %v67
    %v107 = vunpack.c.l.b16 %v68
    %v108 = vunpack.c.l.b16 %v69
    %v109 = vunpack.c.l.b16 %v70
    %v110 = vunpack.c.l.b16 %v71
    %v111 = vunpack.c.l.b16 %v72
    %v112 = vunpack.c.l.b16 %v73
    %v113 = vunpack.c.l.b16 %v74
    %v114 = vpack.c.b16 %v99, %v98
    %v115 = vpack.c.b16 %v101, %v100
    %v116 = vpack.c.b16 %v103, %v102
    %v117 = vpack.c.b16 %v105, %v104
    %v118 = vpack.c.b16 %v107, %v106
    %v119 = vpack.c.b16 %v109, %v108
    %v120 = vpack.c.b16 %v111, %v110
    %v121 = vpack.c.b16 %v113, %v112
    %130 = vmatprep.subr.bf16.mxu0 0
    %131 = vmatpush1.bf16.msra.mxu0 %v121
    %132 = vmatprep.subr.bf16.mxu0 0
    %133 = vmatpush1.bf16.msra.mxu0 %v120
    %134 = vmatprep.subr.bf16.mxu0 0
    %135 = vmatpush1.bf16.msra.mxu0 %v119
    %136 = vmatprep.subr.bf16.mxu0 0
    %137 = vmatpush1.bf16.msra.mxu0 %v118
    %138 = vmatprep.subr.bf16.mxu0 0
    %139 = vmatpush1.bf16.msra.mxu0 %v117
    %140 = vmatprep.subr.bf16.mxu0 0
    %141 = vmatpush1.bf16.msra.mxu0 %v116
    %142 = vmatprep.subr.bf16.mxu0 0
    %143 = vmatpush1.bf16.msra.mxu0 %v115
    %144 = vmatprep.subr.bf16.mxu0 0
    %145 = vmatpush1.bf16.msra.mxu0 %v114
    %146 = vmatprep.subr.bf16.mxu0 0
    %147 = vmatpush2.bf16.msra.mxu0 0
    %148 = vmatprep.subr.bf16.mxu0 0
    %149 = vmatpush2.bf16.msra.mxu0 0
    %150 = vmatprep.subr.bf16.mxu0 0
    %151 = vmatpush2.bf16.msra.mxu0 0
    %152 = vmatprep.subr.bf16.mxu0 0
    %153 = vmatpush2.bf16.msra.mxu0 0
    %154 = vmatprep.subr.bf16.mxu0 0
    %155 = vmatpush2.bf16.msra.mxu0 0
    %156 = vmatprep.subr.bf16.mxu0 0
    %157 = vmatpush2.bf16.msra.mxu0 0
    %158 = vmatprep.subr.bf16.mxu0 0
    %159 = vmatpush2.bf16.msra.mxu0 0
    %160 = vmatprep.subr.bf16.mxu0 0
    %161 = vmatpush2.bf16.msra.mxu0 0
    %162 = vmatprep.mubr.bf16.mxu0 0
    %163 = vmatmul.mubr.bf16.gmra.mxu0 %v58
    %v164 = vpop.f32.mrf.mxu0
    %v165 = vadd.f32 %v80, %v164
    %v166 = vpop.f32.mrf.mxu0
    %v167 = vpop.f32.mrf.mxu0
    %v168 = vpop.f32.mrf.mxu0
    %169 = vdwg.mxu0
    %v170 = vmax.f32 %v165, 0.0
    %v171 = vadd.f32 %v170, %v57
    %s172 = scalar_lea.vmem [#allocation2], 2
    %v173 = vld [vmem:[%s172] sm:$0x3]
    %v174 = vadd.f32 %v171, %v173
    %v175 = vpack.c.bf16 %v174, %v174
    %s176 = scalar_lea.vmem [#allocation5], 64
    %v177 = vld [vmem:[%s176] sm:$0xf]
    %v178 = vld [vmem:[%s176 + $0x4] sm:$0xf]
    %v179 = vld [vmem:[%s176 + $0x8] sm:$0xf]
    %v180 = vld [vmem:[%s176 + $0xc] sm:$0xf]
    %v181 = vld [vmem:[%s176 + $0x10] sm:$0xf]
    %v182 = vld [vmem:[%s176 + $0x14] sm:$0xf]
    %v183 = vld [vmem:[%s176 + $0x18] sm:$0xf]
    %v184 = vld [vmem:[%s176 + $0x1c] sm:$0xf]
    %v185 = vld [vmem:[%s176 + $0x20] sm:$0xf]
    %v186 = vld [vmem:[%s176 + $0x24] sm:$0xf]
    %v187 = vld [vmem:[%s176 + $0x28] sm:$0xf]
    %v188 = vld [vmem:[%s176 + $0x2c] sm:$0xf]
    %v189 = vld [vmem:[%s176 + $0x30] sm:$0xf]
    %v190 = vld [vmem:[%s176 + $0x34] sm:$0xf]
    %v191 = vld [vmem:[%s176 + $0x38] sm:$0xf]
    %v192 = vld [vmem:[%s176 + $0x3c] sm:$0xf]
    %s193 = scalar_lea.vmem [#allocation7], 1
    %v194 = vld [vmem:[%s193] sm:$0x1]
    %v196 = vlaneseq
    %v197 = vshrl.u32 %v196, 7
    %v198 = vsub.s32 0, %v197
    %v199 = vrot.slane %v194, %v198
    %v217 = vunpack.c.l.b16 %v177
    %v218 = vunpack.c.l.b16 %v178
    %v219 = vunpack.c.l.b16 %v179
    %v220 = vunpack.c.l.b16 %v180
    %v221 = vunpack.c.l.b16 %v181
    %v222 = vunpack.c.l.b16 %v182
    %v223 = vunpack.c.l.b16 %v183
    %v224 = vunpack.c.l.b16 %v184
    %v225 = vunpack.c.l.b16 %v185
    %v226 = vunpack.c.l.b16 %v186
    %v227 = vunpack.c.l.b16 %v187
    %v228 = vunpack.c.l.b16 %v188
    %v229 = vunpack.c.l.b16 %v189
    %v230 = vunpack.c.l.b16 %v190
    %v231 = vunpack.c.l.b16 %v191
    %v232 = vunpack.c.l.b16 %v192
    %v233 = vpack.c.b16 %v218, %v217
    %v234 = vpack.c.b16 %v220, %v219
    %v235 = vpack.c.b16 %v222, %v221
    %v236 = vpack.c.b16 %v224, %v223
    %v237 = vpack.c.b16 %v226, %v225
    %v238 = vpack.c.b16 %v228, %v227
    %v239 = vpack.c.b16 %v230, %v229
    %v240 = vpack.c.b16 %v232, %v231
    %249 = vmatprep.subr.bf16.mxu0 0
    %250 = vmatpush1.bf16.msra.mxu0 %v240
    %251 = vmatprep.subr.bf16.mxu0 0
    %252 = vmatpush1.bf16.msra.mxu0 %v239
    %253 = vmatprep.subr.bf16.mxu0 0
    %254 = vmatpush1.bf16.msra.mxu0 %v238
    %255 = vmatprep.subr.bf16.mxu0 0
    %256 = vmatpush1.bf16.msra.mxu0 %v237
    %257 = vmatprep.subr.bf16.mxu0 0
    %258 = vmatpush1.bf16.msra.mxu0 %v236
    %259 = vmatprep.subr.bf16.mxu0 0
    %260 = vmatpush1.bf16.msra.mxu0 %v235
    %261 = vmatprep.subr.bf16.mxu0 0
    %262 = vmatpush1.bf16.msra.mxu0 %v234
    %263 = vmatprep.subr.bf16.mxu0 0
    %264 = vmatpush1.bf16.msra.mxu0 %v233
    %265 = vmatprep.subr.bf16.mxu0 0
    %266 = vmatpush2.bf16.msra.mxu0 0
    %267 = vmatprep.subr.bf16.mxu0 0
    %268 = vmatpush2.bf16.msra.mxu0 0
    %269 = vmatprep.subr.bf16.mxu0 0
    %270 = vmatpush2.bf16.msra.mxu0 0
    %271 = vmatprep.subr.bf16.mxu0 0
    %272 = vmatpush2.bf16.msra.mxu0 0
    %273 = vmatprep.subr.bf16.mxu0 0
    %274 = vmatpush2.bf16.msra.mxu0 0
    %275 = vmatprep.subr.bf16.mxu0 0
    %276 = vmatpush2.bf16.msra.mxu0 0
    %277 = vmatprep.subr.bf16.mxu0 0
    %278 = vmatpush2.bf16.msra.mxu0 0
    %279 = vmatprep.subr.bf16.mxu0 0
    %280 = vmatpush2.bf16.msra.mxu0 0
    %281 = vmatprep.mubr.bf16.mxu0 0
    %282 = vmatmul.mubr.bf16.gmra.mxu0 %v175
    %v283 = vpop.f32.mrf.mxu0
    %v284 = vadd.f32 %v199, %v283
    %v285 = vpop.f32.mrf.mxu0
    %v286 = vpop.f32.mrf.mxu0
    %v287 = vpop.f32.mrf.mxu0
    %288 = vdwg.mxu0
    %v289 = vmax.f32 %v284, 0.0
    %v290 = vadd.f32 %v289, %v174
    %s291 = scalar_lea.vmem [#allocation2], 4
    %v292 = vld [vmem:[%s291] sm:$0x3]
    %v293 = vadd.f32 %v290, %v292
    %v294 = vpack.c.bf16 %v293, %v293
    %s295 = scalar_lea.vmem [#allocation5], 128
    %v296 = vld [vmem:[%s295] sm:$0xf]
    %v297 = vld [vmem:[%s295 + $0x4] sm:$0xf]
    %v298 = vld [vmem:[%s295 + $0x8] sm:$0xf]
    %v299 = vld [vmem:[%s295 + $0xc] sm:$0xf]
    %v300 = vld [vmem:[%s295 + $0x10] sm:$0xf]
    %v301 = vld [vmem:[%s295 + $0x14] sm:$0xf]
    %v302 = vld [vmem:[%s295 + $0x18] sm:$0xf]
    %v303 = vld [vmem:[%s295 + $0x1c] sm:$0xf]
    %v304 = vld [vmem:[%s295 + $0x20] sm:$0xf]
    %v305 = vld [vmem:[%s295 + $0x24] sm:$0xf]
    %v306 = vld [vmem:[%s295 + $0x28] sm:$0xf]
    %v307 = vld [vmem:[%s295 + $0x2c] sm:$0xf]
    %v308 = vld [vmem:[%s295 + $0x30] sm:$0xf]
    %v309 = vld [vmem:[%s295 + $0x34] sm:$0xf]
    %v310 = vld [vmem:[%s295 + $0x38] sm:$0xf]
    %v311 = vld [vmem:[%s295 + $0x3c] sm:$0xf]
    %s312 = scalar_lea.vmem [#allocation7], 2
    %v313 = vld [vmem:[%s312] sm:$0x1]
    %v315 = vlaneseq
    %v316 = vshrl.u32 %v315, 7
    %v317 = vsub.s32 0, %v316
    %v318 = vrot.slane %v313, %v317
    %v336 = vunpack.c.l.b16 %v296
    %v337 = vunpack.c.l.b16 %v297
    %v338 = vunpack.c.l.b16 %v298
    %v339 = vunpack.c.l.b16 %v299
    %v340 = vunpack.c.l.b16 %v300
    %v341 = vunpack.c.l.b16 %v301
    %v342 = vunpack.c.l.b16 %v302
    %v343 = vunpack.c.l.b16 %v303
    %v344 = vunpack.c.l.b16 %v304
    %v345 = vunpack.c.l.b16 %v305
    %v346 = vunpack.c.l.b16 %v306
    %v347 = vunpack.c.l.b16 %v307
    %v348 = vunpack.c.l.b16 %v308
    %v349 = vunpack.c.l.b16 %v309
    %v350 = vunpack.c.l.b16 %v310
    %v351 = vunpack.c.l.b16 %v311
    %v352 = vpack.c.b16 %v337, %v336
    %v353 = vpack.c.b16 %v339, %v338
    %v354 = vpack.c.b16 %v341, %v340
    %v355 = vpack.c.b16 %v343, %v342
    %v356 = vpack.c.b16 %v345, %v344
    %v357 = vpack.c.b16 %v347, %v346
    %v358 = vpack.c.b16 %v349, %v348
    %v359 = vpack.c.b16 %v351, %v350
    %368 = vmatprep.subr.bf16.mxu0 0
    %369 = vmatpush1.bf16.msra.mxu0 %v359
    %370 = vmatprep.subr.bf16.mxu0 0
    %371 = vmatpush1.bf16.msra.mxu0 %v358
    %372 = vmatprep.subr.bf16.mxu0 0
    %373 = vmatpush1.bf16.msra.mxu0 %v357
    %374 = vmatprep.subr.bf16.mxu0 0
    %375 = vmatpush1.bf16.msra.mxu0 %v356
    %376 = vmatprep.subr.bf16.mxu0 0
    %377 = vmatpush1.bf16.msra.mxu0 %v355
    %378 = vmatprep.subr.bf16.mxu0 0
    %379 = vmatpush1.bf16.msra.mxu0 %v354
    %380 = vmatprep.subr.bf16.mxu0 0
    %381 = vmatpush1.bf16.msra.mxu0 %v353
    %382 = vmatprep.subr.bf16.mxu0 0
    %383 = vmatpush1.bf16.msra.mxu0 %v352
    %384 = vmatprep.subr.bf16.mxu0 0
    %385 = vmatpush2.bf16.msra.mxu0 0
    %386 = vmatprep.subr.bf16.mxu0 0
    %387 = vmatpush2.bf16.msra.mxu0 0
    %388 = vmatprep.subr.bf16.mxu0 0
    %389 = vmatpush2.bf16.msra.mxu0 0
    %390 = vmatprep.subr.bf16.mxu0 0
    %391 = vmatpush2.bf16.msra.mxu0 0
    %392 = vmatprep.subr.bf16.mxu0 0
    %393 = vmatpush2.bf16.msra.mxu0 0
    %394 = vmatprep.subr.bf16.mxu0 0
    %395 = vmatpush2.bf16.msra.mxu0 0
    %396 = vmatprep.subr.bf16.mxu0 0
    %397 = vmatpush2.bf16.msra.mxu0 0
    %398 = vmatprep.subr.bf16.mxu0 0
    %399 = vmatpush2.bf16.msra.mxu0 0
    %400 = vmatprep.mubr.bf16.mxu0 0
    %401 = vmatmul.mubr.bf16.gmra.mxu0 %v294
    %v402 = vpop.f32.mrf.mxu0
    %v403 = vadd.f32 %v318, %v402
    %v404 = vpop.f32.mrf.mxu0
    %v405 = vpop.f32.mrf.mxu0
    %v406 = vpop.f32.mrf.mxu0
    %407 = vdwg.mxu0
    %v408 = vmax.f32 %v403, 0.0
    %v409 = vadd.f32 %v408, %v293
    %s410 = scalar_lea.vmem [#allocation2], 6
    %v411 = vld [vmem:[%s410] sm:$0x3]
    %v412 = vadd.f32 %v409, %v411
    %v413 = vpack.c.bf16 %v412, %v412
    %s414 = scalar_lea.vmem [#allocation5], 192
    %v415 = vld [vmem:[%s414] sm:$0xf]
    %v416 = vld [vmem:[%s414 + $0x4] sm:$0xf]
    %v417 = vld [vmem:[%s414 + $0x8] sm:$0xf]
    %v418 = vld [vmem:[%s414 + $0xc] sm:$0xf]
    %v419 = vld [vmem:[%s414 + $0x10] sm:$0xf]
    %v420 = vld [vmem:[%s414 + $0x14] sm:$0xf]
    %v421 = vld [vmem:[%s414 + $0x18] sm:$0xf]
    %v422 = vld [vmem:[%s414 + $0x1c] sm:$0xf]
    %v423 = vld [vmem:[%s414 + $0x20] sm:$0xf]
    %v424 = vld [vmem:[%s414 + $0x24] sm:$0xf]
    %v425 = vld [vmem:[%s414 + $0x28] sm:$0xf]
    %v426 = vld [vmem:[%s414 + $0x2c] sm:$0xf]
    %v427 = vld [vmem:[%s414 + $0x30] sm:$0xf]
    %v428 = vld [vmem:[%s414 + $0x34] sm:$0xf]
    %v429 = vld [vmem:[%s414 + $0x38] sm:$0xf]
    %v430 = vld [vmem:[%s414 + $0x3c] sm:$0xf]
    %s431 = scalar_lea.vmem [#allocation7], 3
    %v432 = vld [vmem:[%s431] sm:$0x1]
    %v434 = vlaneseq
    %v435 = vshrl.u32 %v434, 7
    %v436 = vsub.s32 0, %v435
    %v437 = vrot.slane %v432, %v436
    %v455 = vunpack.c.l.b16 %v415
    %v456 = vunpack.c.l.b16 %v416
    %v457 = vunpack.c.l.b16 %v417
    %v458 = vunpack.c.l.b16 %v418
    %v459 = vunpack.c.l.b16 %v419
    %v460 = vunpack.c.l.b16 %v420
    %v461 = vunpack.c.l.b16 %v421
    %v462 = vunpack.c.l.b16 %v422
    %v463 = vunpack.c.l.b16 %v423
    %v464 = vunpack.c.l.b16 %v424
    %v465 = vunpack.c.l.b16 %v425
    %v466 = vunpack.c.l.b16 %v426
    %v467 = vunpack.c.l.b16 %v427
    %v468 = vunpack.c.l.b16 %v428
    %v469 = vunpack.c.l.b16 %v429
    %v470 = vunpack.c.l.b16 %v430
    %v471 = vpack.c.b16 %v456, %v455
    %v472 = vpack.c.b16 %v458, %v457
    %v473 = vpack.c.b16 %v460, %v459
    %v474 = vpack.c.b16 %v462, %v461
    %v475 = vpack.c.b16 %v464, %v463
    %v476 = vpack.c.b16 %v466, %v465
    %v477 = vpack.c.b16 %v468, %v467
    %v478 = vpack.c.b16 %v470, %v469
    %487 = vmatprep.subr.bf16.mxu0 0
    %488 = vmatpush1.bf16.msra.mxu0 %v478
    %489 = vmatprep.subr.bf16.mxu0 0
    %490 = vmatpush1.bf16.msra.mxu0 %v477
    %491 = vmatprep.subr.bf16.mxu0 0
    %492 = vmatpush1.bf16.msra.mxu0 %v476
    %493 = vmatprep.subr.bf16.mxu0 0
    %494 = vmatpush1.bf16.msra.mxu0 %v475
    %495 = vmatprep.subr.bf16.mxu0 0
    %496 = vmatpush1.bf16.msra.mxu0 %v474
    %497 = vmatprep.subr.bf16.mxu0 0
    %498 = vmatpush1.bf16.msra.mxu0 %v473
    %499 = vmatprep.subr.bf16.mxu0 0
    %500 = vmatpush1.bf16.msra.mxu0 %v472
    %501 = vmatprep.subr.bf16.mxu0 0
    %502 = vmatpush1.bf16.msra.mxu0 %v471
    %503 = vmatprep.subr.bf16.mxu0 0
    %504 = vmatpush2.bf16.msra.mxu0 0
    %505 = vmatprep.subr.bf16.mxu0 0
    %506 = vmatpush2.bf16.msra.mxu0 0
    %507 = vmatprep.subr.bf16.mxu0 0
    %508 = vmatpush2.bf16.msra.mxu0 0
    %509 = vmatprep.subr.bf16.mxu0 0
    %510 = vmatpush2.bf16.msra.mxu0 0
    %511 = vmatprep.subr.bf16.mxu0 0
    %512 = vmatpush2.bf16.msra.mxu0 0
    %513 = vmatprep.subr.bf16.mxu0 0
    %514 = vmatpush2.bf16.msra.mxu0 0
    %515 = vmatprep.subr.bf16.mxu0 0
    %516 = vmatpush2.bf16.msra.mxu0 0
    %517 = vmatprep.subr.bf16.mxu0 0
    %518 = vmatpush2.bf16.msra.mxu0 0
    %519 = vmatprep.mubr.bf16.mxu0 0
    %520 = vmatmul.mubr.bf16.gmra.mxu0 %v413
    %v521 = vpop.f32.mrf.mxu0
    %v522 = vadd.f32 %v437, %v521
    %v523 = vpop.f32.mrf.mxu0
    %v524 = vpop.f32.mrf.mxu0
    %v525 = vpop.f32.mrf.mxu0
    %526 = vdwg.mxu0
    %v527 = vmax.f32 %v522, 0.0
    %v528 = vadd.f32 %v527, %v412
    %529 = vst [vmem:[#allocation8] sm:$0x3] %v528
    // Predicated region
    $region26: #{tpu_custom_call.1} parent=1 // pred_check
      _
    $region27: #{tpu_custom_call.1} parent=1 // pred_check_branch
      %531 = sbr.rel (0) target = $region29
    $region28: #{tpu_custom_call.1} parent=1 // pred_region
      %s533 = ssub.s32 32, 32
      %534 = vsyncadd [#allocation4], %s533
      %s536 = sshll.u32 [#allocation8], 4
      %s537 = int_to_ptr.vmem [resolvable:$true] %s536
      %539 = dma.vmem_to_hbm [thread:$0]  %s537, 32, %s3, [#allocation4]
    $region29: #{tpu_custom_call.1} parent=1 // pred_fallthru
      _
    // Predicated region
    $region30: #{tpu_custom_call.1} parent=1 // pred_check
      _
    $region31: #{tpu_custom_call.1} parent=1 // pred_check_branch
      %541 = sbr.rel (0) target = $region33
    $region32: #{tpu_custom_call.1} parent=1 // pred_region
      %542 = dma.done [#allocation4], 32
    $region33: #{tpu_custom_call.1} parent=1 // pred_fallthru
      _
    %543 = vsyncpa [#allocation3], 1
    %544 = vsyncpa [#allocation6], 1
    %545 = vsyncpa [#allocation4], 1

</llo_original>
